<compile_context>
chip_gen: v7x
topology: tpu7x:2x2x1
jax: 0.10.0
libtpu: 0.0.40
codegen_flags: <defaults>
</compile_context>

<pallas_src>
import jax
import jax.numpy as jnp
from jax import lax
from jax.experimental import pallas as pl
from jax.experimental.pallas import tpu as pltpu

EMBED = 128  # fixed by the module's __init__


def _crossatt_kernel(x2_ref, wv_ref, bv_ref, o_ref):
    # Attention weight over a single kv position is exactly 1 -> out = v.
    # wv is in torch nn.Linear layout (out, in); contract dim 1 with dim 1.
    v = lax.dot_general(
        x2_ref[...], wv_ref[...],
        dimension_numbers=(((1,), (1,)), ((), ())),
        preferred_element_type=jnp.float32,
    )
    o_ref[...] = (v + bv_ref[...]).astype(o_ref.dtype)


def _is_v7x():
    try:
        return "v7" in jax.devices()[0].device_kind.lower()
    except Exception:
        return False


def _tile_cap():
    # v7x: higher HBM BW makes per-step overhead relatively larger -> bigger tiles.
    return 2048 if _is_v7x() else 1024


def _make_row_spec(tile_b, multi_buffer):
    kwargs = {}
    if multi_buffer and hasattr(pl, "Buffered"):
        kwargs = {"pipeline_mode": pl.Buffered(3)}
    try:
        return pl.BlockSpec((tile_b, EMBED), lambda i: (i, 0), **kwargs)
    except TypeError:
        # Older jax without pipeline_mode kwarg: fall back to default buffering.
        return pl.BlockSpec((tile_b, EMBED), lambda i: (i, 0))


def cross_att(x1, x2, wq, bq, wk, bk, wv, bv):
    """Forward pass of CrossAtt.  Weights in torch nn.Linear layout (out, in)."""
    B, E = x1.shape
    assert E == EMBED and x2.shape == (B, E)
    # q/k path is mathematically dead (softmax over a size-1 axis == 1.0).
    del x1, wq, bq, wk, bk

    bv2 = bv[None, :]  # (1, E) — 2-D layout for VMEM

    cap = _tile_cap()
    # Single grid step when the whole batch fits one tile (block == full array
    # dims is always legal); otherwise tile at the cap and let Pallas mask the
    # ragged final block — no padding copy, no output slice.
    tile_b = B if B <= cap else cap
    n_steps = pl.cdiv(B, tile_b)

    multi_buffer = _is_v7x() and n_steps >= 3
    row_spec = _make_row_spec(tile_b, multi_buffer)
    w_spec = pl.BlockSpec((E, E), lambda i: (0, 0))   # grid-invariant weight
    b_spec = pl.BlockSpec((1, E), lambda i: (0, 0))   # grid-invariant bias

    return pl.pallas_call(
        _crossatt_kernel,
        out_shape=jax.ShapeDtypeStruct((B, E), x2.dtype),
        grid=(n_steps,),
        in_specs=[row_spec, w_spec, b_spec],
        out_specs=_make_row_spec(tile_b, multi_buffer),
        compiler_params=pltpu.CompilerParams(
            dimension_semantics=("parallel",)),
    )(x2, wv, bv2)


def _reference(x1, x2, wq, bq, wk, bk, wv, bv):
    # Full fidelity reference: includes q/k projections and the softmax.
    q = x1 @ wq.T + bq
    k = x2 @ wk.T + bk
    v = x2 @ wv.T + bv
    scores = (q[:, None, :] @ jnp.swapaxes(k[:, None, :], 1, 2)) / jnp.sqrt(128.0)
    att = jax.nn.softmax(scores, axis=-1)          # (B, 1, 1) -> ones
    out = att @ v[:, None, :]
    return out[:, 0, :]


if __name__ == "__main__":
    key = jax.random.PRNGKey(0)
    kx1, kx2, k1, k2, k3, k4, k5, k6 = jax.random.split(key, 8)

    B = 16
    x1 = jax.random.normal(kx1, (B, EMBED), dtype=jnp.float32)
    x2 = jax.random.normal(kx2, (B, EMBED), dtype=jnp.float32)

    # Deterministic parameter init (torch.nn.Linear-like uniform bounds).
    bound = 1.0 / jnp.sqrt(float(EMBED))
    wq = jax.random.uniform(k1, (EMBED, EMBED), jnp.float32, -bound, bound)
    bq = jax.random.uniform(k2, (EMBED,), jnp.float32, -bound, bound)
    wk = jax.random.uniform(k3, (EMBED, EMBED), jnp.float32, -bound, bound)
    bk = jax.random.uniform(k4, (EMBED,), jnp.float32, -bound, bound)
    wv = jax.random.uniform(k5, (EMBED, EMBED), jnp.float32, -bound, bound)
    bv = jax.random.uniform(k6, (EMBED,), jnp.float32, -bound, bound)

    out = cross_att(x1, x2, wq, bq, wk, bk, wv, bv)
    out = jax.block_until_ready(out)

    ref = _reference(x1, x2, wq, bq, wk, bk, wv, bv)
    assert out.shape == (B, EMBED)
    assert jnp.allclose(out, ref, atol=1e-4, rtol=1e-4), "mismatch vs reference"

    # Also exercise the multi-step / ragged-edge path (no pad, no slice).
    B2 = 20
    x2b = jax.random.normal(kx2, (B2, EMBED), dtype=jnp.float32)
    x1b = jax.random.normal(kx1, (B2, EMBED), dtype=jnp.float32)
    out2 = jax.block_until_ready(cross_att(x1b, x2b, wq, bq, wk, bk, wv, bv))
    ref2 = _reference(x1b, x2b, wq, bq, wk, bk, wv, bv)
    assert jnp.allclose(out2, ref2, atol=1e-4, rtol=1e-4), "mismatch (ragged)"

    print("KERNEL_OK")
</pallas_src>

<mosaic_0001>
module attributes {stable_mosaic.version = 11 : i64} {
  func.func @_crossatt_kernel(%arg0: i32, %arg1: memref<16x128xf32, #tpu.memory_space<vmem>>, %arg2: memref<128x128xf32, #tpu.memory_space<vmem>>, %arg3: memref<1x128xf32, #tpu.memory_space<vmem>>, %arg4: memref<16x128xf32, #tpu.memory_space<vmem>>) attributes {dimension_semantics = [#tpu.dimension_semantics<parallel>], iteration_bounds = array<i64: 1>, scalar_prefetch = 0 : i64, scratch_operands = 0 : i64, tpu.core_type = #tpu.core_type<tc>, window_params = [{transform_indices = @transform_0, window_bounds = array<i64: 16, 128>}, {pipeline_mode = #tpu.pipeline_mode<synchronous>, transform_indices = @transform_1, window_bounds = array<i64: 128, 128>}, {pipeline_mode = #tpu.pipeline_mode<synchronous>, transform_indices = @transform_2, window_bounds = array<i64: 1, 128>}, {transform_indices = @transform_3, window_bounds = array<i64: 16, 128>}]} {
    %c0 = arith.constant 0 : index
    %c0_0 = arith.constant 0 : index
    %0 = vector.load %arg1[%c0, %c0_0] : memref<16x128xf32, #tpu.memory_space<vmem>>, vector<16x128xf32>
    %c0_1 = arith.constant 0 : index
    %c0_2 = arith.constant 0 : index
    %1 = vector.load %arg2[%c0_1, %c0_2] : memref<128x128xf32, #tpu.memory_space<vmem>>, vector<128x128xf32>
    %cst = arith.constant dense<0.000000e+00> : vector<16x128xf32>
    %2 = tpu.matmul %0, %1, %cst {dimension_numbers = #tpu.dot_dimension_numbers<[1], [1], [0], [0], [0, 0, 1, 0], [], []>} : vector<16x128xf32>, vector<128x128xf32>, vector<16x128xf32> -> vector<16x128xf32>
    %c0_3 = arith.constant 0 : index
    %c0_4 = arith.constant 0 : index
    %3 = vector.load %arg3[%c0_3, %c0_4] : memref<1x128xf32, #tpu.memory_space<vmem>>, vector<1x128xf32>
    %4 = vector.broadcast %3 : vector<1x128xf32> to vector<16x128xf32>
    %5 = arith.addf %2, %4 : vector<16x128xf32>
    %c0_5 = arith.constant 0 : index
    %c0_6 = arith.constant 0 : index
    %6 = vector.load %arg4[%c0_5, %c0_6] : memref<16x128xf32, #tpu.memory_space<vmem>>, vector<16x128xf32>
    tpu.vector_store %arg4[%c0_5, %c0_6], %5 {strides = array<i32>} : memref<16x128xf32, #tpu.memory_space<vmem>>, vector<16x128xf32>,
    return
  }
  func.func @transform_0(%arg0: i32) -> (i32, i32) {
    %c0_i32 = arith.constant 0 : i32
    %c0_i32_0 = arith.constant 0 : i32
    return %arg0, %c0_i32 : i32, i32
  }
  func.func @transform_1(%arg0: i32) -> (i32, i32) {
    %c0_i32 = arith.constant 0 : i32
    %c0_i32_0 = arith.constant 0 : i32
    %c0_i32_1 = arith.constant 0 : i32
    return %c0_i32, %c0_i32_0 : i32, i32
  }
  func.func @transform_2(%arg0: i32) -> (i32, i32) {
    %c0_i32 = arith.constant 0 : i32
    %c0_i32_0 = arith.constant 0 : i32
    %c0_i32_1 = arith.constant 0 : i32
    return %c0_i32, %c0_i32_0 : i32, i32
  }
  func.func @transform_3(%arg0: i32) -> (i32, i32) {
    %c0_i32 = arith.constant 0 : i32
    %c0_i32_0 = arith.constant 0 : i32
    return %arg0, %c0_i32 : i32, i32
  }
}

</mosaic_0001>

<llo_original>
// kernel: tpu_custom_call.1
$region0: #{tpu_custom_call.1}
  #allocation0 [shape = 'u32[]', space=smem, size = 0x4, offset = 0x4, fixed_abs, tag = 'smem constant byte address 0x4 - core index']
  #allocation1 [shape = 'u32[144,128]{1,0:T(1,128)}', space=vmem, size = 0x12000, scoped, tag = 'internal scratch']
  %s0 = inlined_call_operand.hbm [shape: f32[16,128], index: 0, kind: input, shape index: {}]
  %s1 = inlined_call_operand.hbm [shape: f32[128,128], index: 1, kind: input, shape index: {}]
  %s2 = inlined_call_operand.vmem [shape: f32[1,128], index: 2, kind: input, shape index: {}]
  %s3 = inlined_call_operand.hbm [shape: f32[16,128], index: 3, kind: output, shape index: {}]
  %s4 = sld [smem:[#allocation0]]
  $region30: #{tpu_custom_call.1} parent=0
    _
  %s6 = ssub.s32 1, %s4
  %s7 = scalar_select 0, %s6, %s4
  $region1: #{tpu_custom_call.1} parent=0
    #allocation2 [shape = 'u8[8192]{0}', space=vmem, size = 0x2000, scoped, tag = 'input window, operand 0, single buffered']
    #allocation3 [shape = 's32[1]{0}', space=sflag, size = 0x4, scoped, tag = 'scoped memory for tpu_custom_call.1']
    #allocation4 [shape = 's32[1]{0}', space=sflag, size = 0x4, scoped, tag = 'scoped memory for tpu_custom_call.1']
    #allocation5 [shape = 'u8[65536]{0}', space=vmem, size = 0x10000, scoped, tag = 'input window, operand 1, single buffered']
    #allocation6 [shape = 's32[1]{0}', space=sflag, size = 0x4, scoped, tag = 'scoped memory for tpu_custom_call.1']
    #allocation7 [shape = 'u8[8192]{0}', space=vmem, size = 0x2000, scoped, tag = 'output window, operand 0, single buffered']
    %8 = vsyncpa [#allocation3], 0
    %9 = vsyncpa [#allocation6], 0
    %10 = vsyncpa [#allocation4], 0
    // Predicated region
    $region2: #{tpu_custom_call.1} parent=1 // pred_check
      _
    $region3: #{tpu_custom_call.1} parent=1 // pred_check_branch
      %12 = sbr.rel (0) target = $region5
    $region4: #{tpu_custom_call.1} parent=1 // pred_region
      %s14 = ssub.s32 256, 256
      %15 = vsyncadd [#allocation3], %s14
      %s16 = sshll.u32 [#allocation2], 4
      %s17 = int_to_ptr.vmem [resolvable:$true] %s16
      %22 = dma.hbm_to_vmem [thread:$0]  %s0, 256, %s17, [#allocation3], 128, 128, 8
    $region5: #{tpu_custom_call.1} parent=1 // pred_fallthru
      _
    // Predicated region
    $region6: #{tpu_custom_call.1} parent=1 // pred_check
      _
    $region7: #{tpu_custom_call.1} parent=1 // pred_check_branch
      %24 = sbr.rel (0) target = $region9
    $region8: #{tpu_custom_call.1} parent=1 // pred_region
      %s26 = ssub.s32 2048, 2048
      %27 = vsyncadd [#allocation6], %s26
      %s28 = sshll.u32 [#allocation5], 4
      %s29 = int_to_ptr.vmem [resolvable:$true] %s28
      %34 = dma.hbm_to_vmem [thread:$0]  %s1, 2048, %s29, [#allocation6], 128, 128, 8
    $region9: #{tpu_custom_call.1} parent=1 // pred_fallthru
      _
    // Predicated region
    $region10: #{tpu_custom_call.1} parent=1 // pred_check
      _
    $region11: #{tpu_custom_call.1} parent=1 // pred_check_branch
      %36 = sbr.rel (0) target = $region13
    $region12: #{tpu_custom_call.1} parent=1 // pred_region
      _
    $region13: #{tpu_custom_call.1} parent=1 // pred_fallthru
      _
    // Predicated region
    $region14: #{tpu_custom_call.1} parent=1 // pred_check
      _
    $region15: #{tpu_custom_call.1} parent=1 // pred_check_branch
      %38 = sbr.rel (0) target = $region17
    $region16: #{tpu_custom_call.1} parent=1 // pred_region
      %39 = dma.done [#allocation3], 256
    $region17: #{tpu_custom_call.1} parent=1 // pred_fallthru
      _
    // Predicated region
    $region18: #{tpu_custom_call.1} parent=1 // pred_check
      _
    $region19: #{tpu_custom_call.1} parent=1 // pred_check_branch
      %41 = sbr.rel (0) target = $region21
    $region20: #{tpu_custom_call.1} parent=1 // pred_region
      %42 = dma.done [#allocation6], 2048
    $region21: #{tpu_custom_call.1} parent=1 // pred_fallthru
      _
    %v43 = vld [vmem:[#allocation2] sm:$0xff]
    %v44 = vld [vmem:[#allocation2 + $0x8] sm:$0xff]
    %v45 = vld [vmem:[#allocation5] sm:$0xff]
    %v46 = vld [vmem:[#allocation5 + $0x8] sm:$0xff]
    %v47 = vld [vmem:[#allocation5 + $0x10] sm:$0xff]
    %v48 = vld [vmem:[#allocation5 + $0x18] sm:$0xff]
    %v49 = vld [vmem:[#allocation5 + $0x20] sm:$0xff]
    %v50 = vld [vmem:[#allocation5 + $0x28] sm:$0xff]
    %v51 = vld [vmem:[#allocation5 + $0x30] sm:$0xff]
    %v52 = vld [vmem:[#allocation5 + $0x38] sm:$0xff]
    %v53 = vld [vmem:[#allocation5 + $0x40] sm:$0xff]
    %v54 = vld [vmem:[#allocation5 + $0x48] sm:$0xff]
    %v55 = vld [vmem:[#allocation5 + $0x50] sm:$0xff]
    %v56 = vld [vmem:[#allocation5 + $0x58] sm:$0xff]
    %v57 = vld [vmem:[#allocation5 + $0x60] sm:$0xff]
    %v58 = vld [vmem:[#allocation5 + $0x68] sm:$0xff]
    %v59 = vld [vmem:[#allocation5 + $0x70] sm:$0xff]
    %v60 = vld [vmem:[#allocation5 + $0x78] sm:$0xff]
    %v61 = vld [vmem:[%s2] sm:$0x1]
    %v63 = vlaneseq
    %v64 = vshrl.u32 %v63, 7
    %v65 = vsub.s32 0, %v64
    %v66 = vrot.slane %v61, %v65
    %68 = vmatprep.subr.mxu0 0.0
    %69 = vmatpush1.xpose.msra.mxu0 %v45
    %70 = vmatprep.subr.mxu0 0.0
    %71 = vmatpush1.xpose.msra.mxu0 %v46
    %72 = vmatprep.subr.mxu0 0.0
    %73 = vmatpush1.xpose.msra.mxu0 %v47
    %74 = vmatprep.subr.mxu0 0.0
    %75 = vmatpush1.xpose.msra.mxu0 %v48
    %76 = vmatprep.subr.mxu0 0.0
    %77 = vmatpush1.xpose.msra.mxu0 %v49
    %78 = vmatprep.subr.mxu0 0.0
    %79 = vmatpush1.xpose.msra.mxu0 %v50
    %80 = vmatprep.subr.mxu0 0.0
    %81 = vmatpush1.xpose.msra.mxu0 %v51
    %82 = vmatprep.subr.mxu0 0.0
    %83 = vmatpush1.xpose.msra.mxu0 %v52
    %84 = vmatprep.subr.mxu0 0.0
    %85 = vmatpush1.xpose.msra.mxu0 %v53
    %86 = vmatprep.subr.mxu0 0.0
    %87 = vmatpush1.xpose.msra.mxu0 %v54
    %88 = vmatprep.subr.mxu0 0.0
    %89 = vmatpush1.xpose.msra.mxu0 %v55
    %90 = vmatprep.subr.mxu0 0.0
    %91 = vmatpush1.xpose.msra.mxu0 %v56
    %92 = vmatprep.subr.mxu0 0.0
    %93 = vmatpush1.xpose.msra.mxu0 %v57
    %94 = vmatprep.subr.mxu0 0.0
    %95 = vmatpush1.xpose.msra.mxu0 %v58
    %96 = vmatprep.subr.mxu0 0.0
    %97 = vmatpush1.xpose.msra.mxu0 %v59
    %98 = vmatprep.subr.mxu0 0.0
    %99 = vmatpush1.xpose.msra.mxu0 %v60
    %100 = vmatprep.subr.mxu0 0.0
    %101 = vmatpush1.xpose.msra.mxu0 0.0
    %102 = vmatprep.subr.mxu0 0.0
    %103 = vmatpush1.xpose.msra.mxu0 0.0
    %104 = vmatprep.subr.mxu0 0.0
    %105 = vmatpush1.xpose.msra.mxu0 0.0
    %106 = vmatprep.subr.mxu0 0.0
    %107 = vmatpush1.xpose.msra.mxu0 0.0
    %108 = vmatprep.subr.mxu0 0.0
    %109 = vmatpush1.xpose.msra.mxu0 0.0
    %110 = vmatprep.subr.mxu0 0.0
    %111 = vmatpush1.xpose.msra.mxu0 0.0
    %112 = vmatprep.subr.mxu0 0.0
    %113 = vmatpush1.xpose.msra.mxu0 0.0
    %114 = vmatprep.subr.mxu0 0.0
    %115 = vmatpush1.xpose.msra.mxu0 0.0
    %116 = vmatprep.subr.mxu0 0.0
    %117 = vmatpush1.xpose.msra.mxu0 0.0
    %118 = vmatprep.subr.mxu0 0.0
    %119 = vmatpush1.xpose.msra.mxu0 0.0
    %120 = vmatprep.subr.mxu0 0.0
    %121 = vmatpush1.xpose.msra.mxu0 0.0
    %122 = vmatprep.subr.mxu0 0.0
    %123 = vmatpush1.xpose.msra.mxu0 0.0
    %124 = vmatprep.subr.mxu0 0.0
    %125 = vmatpush1.xpose.msra.mxu0 0.0
    %126 = vmatprep.subr.mxu0 0.0
    %127 = vmatpush1.xpose.msra.mxu0 0.0
    %128 = vmatprep.subr.mxu0 0.0
    %129 = vmatpush1.xpose.msra.mxu0 0.0
    %130 = vmatprep.subr.mxu0 0.0
    %131 = vmatpush1.xpose.msra.mxu0 0.0
    %132 = vmatprep.mubr.f32.mxu0 0.0
    %133 = vmatmul.mubr.f32.gmra.mrb[0].mxu0 %v43
    %v134 = vpop.f32.mrb[0].mxu0
    %v135 = vadd.f32 %v66, %v134
    %v136 = vpop.f32.mrb[0].mxu0
    %137 = vmatprep.mubr.f32.mxu0 0.0
    %138 = vmatmul.mubr.f32.gmra.mrb[0].mxu0 %v44
    %v139 = vpop.f32.mrb[0].mxu0
    %v140 = vadd.f32 %v66, %v139
    %v141 = vpop.f32.mrb[0].mxu0
    %142 = vdwg.mxu0
    %143 = vst [vmem:[#allocation7] sm:$0xff] %v135
    %144 = vst [vmem:[#allocation7 + $0x8] sm:$0xff] %v140
    // Predicated region
    $region22: #{tpu_custom_call.1} parent=1 // pred_check
      _
    $region23: #{tpu_custom_call.1} parent=1 // pred_check_branch
      %146 = sbr.rel (0) target = $region25
    $region24: #{tpu_custom_call.1} parent=1 // pred_region
      %s148 = ssub.s32 256, 256
      %149 = vsyncadd [#allocation4], %s148
      %s150 = sshll.u32 [#allocation7], 4
      %s151 = int_to_ptr.vmem [resolvable:$true] %s150
      %156 = dma.vmem_to_hbm [thread:$0]  %s151, 256, %s3, [#allocation4], 128, 128, 8
    $region25: #{tpu_custom_call.1} parent=1 // pred_fallthru
      _
    // Predicated region
    $region26: #{tpu_custom_call.1} parent=1 // pred_check
      _
    $region27: #{tpu_custom_call.1} parent=1 // pred_check_branch
      %158 = sbr.rel (0) target = $region29
    $region28: #{tpu_custom_call.1} parent=1 // pred_region
      %159 = dma.done [#allocation4], 256
    $region29: #{tpu_custom_call.1} parent=1 // pred_fallthru
      _
    %160 = vsyncpa [#allocation3], 1
    %161 = vsyncpa [#allocation6], 1
    %162 = vsyncpa [#allocation4], 1

</llo_original>
